<compile_context>
chip_gen: v7x
topology: tpu7x:2x2x1
jax: 0.10.0
libtpu: 0.0.40
codegen_flags: <defaults>
</compile_context>

<pallas_src>
import functools

import jax
import jax.numpy as jnp
from jax.experimental import pallas as pl
from jax.experimental.pallas import tpu as pltpu

DROPOUT_P = 0.1
RDROP_COEF = 0.1
NUM_CLASSES = 2
SUBLANE = 8
LANE = 128


def _round_up(x, m):
    return ((x + m - 1) // m) * m


# ----------------------------------------------------------------------------
# Pallas kernel: pooler + fused dropout x2 + classifier + RDrop KL + CE + probs
# ----------------------------------------------------------------------------
def _qm_head_kernel(labels_ref,    # VMEM (PB, 1)   int32 labels (padded rows = 0)
                    h_ref,         # VMEM (PB, PH)  CLS hidden state (zero padded)
                    wp_ref,        # VMEM (PH, PH)  pooler weight (zero padded)
                    bp_ref,        # VMEM (1, PH)   pooler bias
                    wc_ref,        # VMEM (PH, 128) classifier weight (zero padded)
                    bc_ref,        # VMEM (1, 128)  classifier bias
                    mask_ref,      # VMEM (2PB, PH) dropout keep mask (0/1 f32)
                    loss_ref,      # SMEM (1, 1)    scalar loss out
                    probs_ref,     # VMEM (PB, 128) lane-dense probs slab
                    *, batch, dropout_p, rdrop_coef):
    PB, PH = h_ref.shape
    PC = probs_ref.shape[1]

    # --- BERT pooler: pooled = tanh(hidden[:, 0, :] @ Wp + bp) ---------------
    pooled = jnp.tanh(
        jnp.dot(h_ref[...], wp_ref[...], preferred_element_type=jnp.float32)
        + bp_ref[...])                                            # (PB, PH)

    # --- fused dropout x2 + classifier: stack the two dropout samples along
    #     the batch (sublane) axis and do a single MXU matmul. ---------------
    keep_scale = 1.0 / (1.0 - dropout_p)
    x = jnp.concatenate([pooled, pooled], axis=0) * mask_ref[...] * keep_scale
    logits = (jnp.dot(x, wc_ref[...], preferred_element_type=jnp.float32)
              + bc_ref[...])                                      # (2PB, PC)

    # --- 2-class closed-form log-softmax on the logit difference.
    #     Padded logit lanes (zero weight columns) never enter the math. -----
    d = logits[:, 1:2] - logits[:, 0:1]                           # (2PB, 1)

    def softplus(z):
        return jnp.maximum(z, 0.0) + jnp.log(1.0 + jnp.exp(-jnp.abs(z)))

    lsm0 = -softplus(d)      # log softmax, class 0
    lsm1 = -softplus(-d)     # log softmax, class 1

    lsm0_1, lsm0_2 = lsm0[:PB], lsm0[PB:]                         # pass1 / pass2
    lsm1_1, lsm1_2 = lsm1[:PB], lsm1[PB:]

    # valid-row mask: padded batch rows contribute nothing to the losses
    row = jax.lax.broadcasted_iota(jnp.int32, (PB, 1), 0)
    valid = (row < batch).astype(jnp.float32)

    # --- RDropLoss: F.kl_div(log_softmax(p), softmax(q)) with default
    #     reduction='mean' (mean over ALL batch*2 elements), symmetrized, /2 --
    n_elem = float(batch * NUM_CLASSES)
    p_elem = (jnp.exp(lsm0_2) * (lsm0_2 - lsm0_1)
              + jnp.exp(lsm1_2) * (lsm1_2 - lsm1_1))              # (PB, 1)
    q_elem = (jnp.exp(lsm0_1) * (lsm0_1 - lsm0_2)
              + jnp.exp(lsm1_1) * (lsm1_1 - lsm1_2))              # (PB, 1)
    kl_loss = 0.5 * (jnp.sum(p_elem * valid) + jnp.sum(q_elem * valid)) / n_elem

    # --- CrossEntropyLoss(logits1, labels), mean over the real batch ---------
    is_one = (labels_ref[...] == 1).astype(jnp.float32)           # (PB, 1)
    ce_row = -(lsm0_1 * (1.0 - is_one) + lsm1_1 * is_one)
    ce_loss = jnp.sum(ce_row * valid) / float(batch)

    loss_ref[0, 0] = ce_loss + rdrop_coef * kl_loss

    # --- probs = Softmax()(logits1), written into a lane-dense (PB, 128) slab
    col = jax.lax.broadcasted_iota(jnp.int32, (PB, PC), 1)
    p0 = jnp.exp(lsm0_1)                                          # (PB, 1)
    p1 = jnp.exp(lsm1_1)
    probs_ref[...] = jnp.where(col == 0, p0, jnp.where(col == 1, p1, 0.0))


# ----------------------------------------------------------------------------
# Wrapper: tile-padding, dropout mask generation, pallas_call
# ----------------------------------------------------------------------------
def question_matching_head(h_cls, wp, bp, wc, bc, labels, dropout_key,
                           *, dropout_p=DROPOUT_P, rdrop_coef=RDROP_COEF):
    B, H = h_cls.shape
    PB = _round_up(B, SUBLANE)
    PH = _round_up(H, LANE)
    PC = LANE                       # lane-dense classifier output / probs slab

    # zero-pad everything to vreg-aligned tiles once, wrapper-side
    h_p = jnp.zeros((PB, PH), jnp.float32).at[:B, :H].set(h_cls)
    wp_p = jnp.zeros((PH, PH), jnp.float32).at[:H, :H].set(wp)
    bp_p = jnp.zeros((1, PH), jnp.float32).at[:, :H].set(bp)
    wc_p = jnp.zeros((PH, PC), jnp.float32).at[:H, :NUM_CLASSES].set(wc)
    bc_p = jnp.zeros((1, PC), jnp.float32).at[:, :NUM_CLASSES].set(bc)
    lbl_p = jnp.zeros((PB, 1), jnp.int32).at[:B, 0].set(labels.astype(jnp.int32))

    # two independent train-mode dropout keep-masks (one draw, tile padded)
    keep_mask = jax.random.bernoulli(
        dropout_key, 1.0 - dropout_p, (2 * PB, PH)).astype(jnp.float32)

    vmem = pl.BlockSpec(memory_space=pltpu.MemorySpace.VMEM)
    smem = pl.BlockSpec(memory_space=pltpu.MemorySpace.SMEM)

    kernel = functools.partial(_qm_head_kernel, batch=B,
                               dropout_p=dropout_p, rdrop_coef=rdrop_coef)

    loss, probs_pad = pl.pallas_call(
        kernel,
        out_shape=(jax.ShapeDtypeStruct((1, 1), jnp.float32),
                   jax.ShapeDtypeStruct((PB, PC), jnp.float32)),
        in_specs=[vmem, vmem, vmem, vmem, vmem, vmem, vmem],
        out_specs=(smem, vmem),
    )(lbl_p, h_p, wp_p, bp_p, wc_p, bc_p, keep_mask)

    return loss[0, 0], probs_pad[:B, :NUM_CLASSES]


# ----------------------------------------------------------------------------
# Plain-JAX glue: deterministic stand-in for BertModel producing the CLS hidden
# ----------------------------------------------------------------------------
def bert_stub_cls_hidden(token_ids, token_type_ids, params):
    B, S = token_ids.shape
    h = (params["word_emb"][token_ids]
         + params["type_emb"][token_type_ids]
         + params["pos_emb"][jnp.arange(S)][None, :, :])
    mu = jnp.mean(h, axis=-1, keepdims=True)
    var = jnp.var(h, axis=-1, keepdims=True)
    h = (h - mu) / jnp.sqrt(var + 1e-12)
    return h[:, 0, :]                      # CLS token hidden state (B, H)


def question_matching_forward(params, token_ids, token_type_ids,
                              attention_masks, labels, dropout_key):
    # torch.squeeze(...) of the (B, 1, S) / (B, 1) inputs
    token_ids = jnp.squeeze(token_ids, axis=1)
    token_type_ids = jnp.squeeze(token_type_ids, axis=1)
    _ = jnp.squeeze(attention_masks, axis=1)       # unused by the stub encoder
    labels = jnp.squeeze(labels, axis=-1)

    h_cls = bert_stub_cls_hidden(token_ids, token_type_ids, params)

    loss, probs = question_matching_head(
        h_cls.astype(jnp.float32),
        params["pooler_w"], params["pooler_b"],
        params["cls_w"], params["cls_b"],
        labels, dropout_key)
    return loss, probs


# ----------------------------------------------------------------------------
def init_params(key, vocab=50, type_vocab=2, max_pos=16, hidden=32):
    k = jax.random.split(key, 6)
    std = 0.02
    return {
        "word_emb": std * jax.random.normal(k[0], (vocab, hidden), jnp.float32),
        "type_emb": std * jax.random.normal(k[1], (type_vocab, hidden), jnp.float32),
        "pos_emb":  std * jax.random.normal(k[2], (max_pos, hidden), jnp.float32),
        "pooler_w": std * jax.random.normal(k[3], (hidden, hidden), jnp.float32),
        "pooler_b": jnp.zeros((1, hidden), jnp.float32),
        "cls_w":    std * jax.random.normal(k[4], (hidden, NUM_CLASSES), jnp.float32),
        "cls_b":    jnp.zeros((1, NUM_CLASSES), jnp.float32),  # zeroed per _init_weights
    }


if __name__ == "__main__":
    B, S, H, VOCAB = 2, 8, 32, 50

    key = jax.random.PRNGKey(0)
    kp, kt, ktt, klab, kdrop = jax.random.split(key, 5)

    params = init_params(kp, vocab=VOCAB, max_pos=S, hidden=H)

    token_ids = jax.random.randint(kt, (B, 1, S), 0, VOCAB, dtype=jnp.int32)
    token_type_ids = jax.random.randint(ktt, (B, 1, S), 0, 2, dtype=jnp.int32)
    attention_masks = jnp.ones((B, 1, S), jnp.int32)
    labels = jax.random.randint(klab, (B, 1), 0, NUM_CLASSES, dtype=jnp.int32)

    loss, probs = question_matching_forward(
        params, token_ids, token_type_ids, attention_masks, labels, kdrop)
    jax.block_until_ready((loss, probs))

    assert probs.shape == (B, NUM_CLASSES)
    assert bool(jnp.isfinite(loss))
    assert bool(jnp.all(jnp.abs(jnp.sum(probs, axis=-1) - 1.0) < 1e-5))
    print("KERNEL_OK")
</pallas_src>

<mosaic_0001>
module attributes {stable_mosaic.version = 11 : i64} {
  func.func @_qm_head_kernel(%arg0: memref<8x1xi32, #tpu.memory_space<vmem>>, %arg1: memref<8x128xf32, #tpu.memory_space<vmem>>, %arg2: memref<128x128xf32, #tpu.memory_space<vmem>>, %arg3: memref<1x128xf32, #tpu.memory_space<vmem>>, %arg4: memref<128x128xf32, #tpu.memory_space<vmem>>, %arg5: memref<1x128xf32, #tpu.memory_space<vmem>>, %arg6: memref<16x128xf32, #tpu.memory_space<vmem>>, %arg7: memref<1x1xf32, #tpu.memory_space<smem>>, %arg8: memref<8x128xf32, #tpu.memory_space<vmem>>) attributes {dimension_semantics = [], scalar_prefetch = 0 : i64, scratch_operands = 0 : i64, tpu.core_type = #tpu.core_type<tc>} {
    %c0 = arith.constant 0 : index
    %c0_0 = arith.constant 0 : index
    %0 = vector.load %arg1[%c0, %c0_0] : memref<8x128xf32, #tpu.memory_space<vmem>>, vector<8x128xf32>
    %c0_1 = arith.constant 0 : index
    %c0_2 = arith.constant 0 : index
    %1 = vector.load %arg2[%c0_1, %c0_2] : memref<128x128xf32, #tpu.memory_space<vmem>>, vector<128x128xf32>
    %cst = arith.constant dense<0.000000e+00> : vector<8x128xf32>
    %2 = tpu.matmul %0, %1, %cst {dimension_numbers = #tpu.dot_dimension_numbers<[1], [0], [0], [1], [0, 0, 1, 1], [], []>} : vector<8x128xf32>, vector<128x128xf32>, vector<8x128xf32> -> vector<8x128xf32>
    %c0_3 = arith.constant 0 : index
    %c0_4 = arith.constant 0 : index
    %3 = vector.load %arg3[%c0_3, %c0_4] : memref<1x128xf32, #tpu.memory_space<vmem>>, vector<1x128xf32>
    %4 = vector.broadcast %3 : vector<1x128xf32> to vector<8x128xf32>
    %5 = arith.addf %2, %4 : vector<8x128xf32>
    %6 = math.tanh %5 : vector<8x128xf32>
    %7 = tpu.concatenate %6, %6 in 0 : vector<8x128xf32>, vector<8x128xf32> -> vector<16x128xf32>
    %c0_5 = arith.constant 0 : index
    %c0_6 = arith.constant 0 : index
    %8 = vector.load %arg6[%c0_5, %c0_6] : memref<16x128xf32, #tpu.memory_space<vmem>>, vector<16x128xf32>
    %9 = arith.mulf %7, %8 : vector<16x128xf32>
    %cst_7 = arith.constant 1.11111116 : f32
    %10 = vector.broadcast %cst_7 : f32 to vector<16x128xf32>
    %11 = arith.mulf %9, %10 : vector<16x128xf32>
    %c0_8 = arith.constant 0 : index
    %c0_9 = arith.constant 0 : index
    %12 = vector.load %arg4[%c0_8, %c0_9] : memref<128x128xf32, #tpu.memory_space<vmem>>, vector<128x128xf32>
    %cst_10 = arith.constant dense<0.000000e+00> : vector<16x128xf32>
    %13 = tpu.matmul %11, %12, %cst_10 {dimension_numbers = #tpu.dot_dimension_numbers<[1], [0], [0], [1], [0, 0, 1, 1], [], []>} : vector<16x128xf32>, vector<128x128xf32>, vector<16x128xf32> -> vector<16x128xf32>
    %c0_11 = arith.constant 0 : index
    %c0_12 = arith.constant 0 : index
    %14 = vector.load %arg5[%c0_11, %c0_12] : memref<1x128xf32, #tpu.memory_space<vmem>>, vector<1x128xf32>
    %15 = vector.broadcast %14 : vector<1x128xf32> to vector<16x128xf32>
    %16 = arith.addf %13, %15 : vector<16x128xf32>
    %17 = vector.extract_strided_slice %16 {offsets = [0, 1], sizes = [16, 1], strides = [1, 1]} : vector<16x128xf32> to vector<16x1xf32>
    %18 = vector.extract_strided_slice %16 {offsets = [0, 0], sizes = [16, 1], strides = [1, 1]} : vector<16x128xf32> to vector<16x1xf32>
    %19 = arith.subf %17, %18 : vector<16x1xf32>
    %cst_13 = arith.constant 0.000000e+00 : f32
    %20 = vector.broadcast %cst_13 : f32 to vector<16x1xf32>
    %21 = arith.maximumf %19, %20 : vector<16x1xf32>
    %22 = math.absf %19 : vector<16x1xf32>
    %cst_14 = arith.constant 0.000000e+00 : f32
    %23 = vector.broadcast %cst_14 : f32 to vector<16x1xf32>
    %24 = arith.subf %23, %22 : vector<16x1xf32>
    %25 = math.exp %24 : vector<16x1xf32>
    %cst_15 = arith.constant 1.000000e+00 : f32
    %26 = vector.broadcast %cst_15 : f32 to vector<16x1xf32>
    %27 = arith.addf %26, %25 : vector<16x1xf32>
    %28 = math.log %27 : vector<16x1xf32>
    %29 = arith.addf %21, %28 : vector<16x1xf32>
    %cst_16 = arith.constant 0.000000e+00 : f32
    %30 = vector.broadcast %cst_16 : f32 to vector<16x1xf32>
    %31 = arith.subf %30, %29 : vector<16x1xf32>
    %cst_17 = arith.constant 0.000000e+00 : f32
    %32 = vector.broadcast %cst_17 : f32 to vector<16x1xf32>
    %33 = arith.subf %32, %19 : vector<16x1xf32>
    %cst_18 = arith.constant 0.000000e+00 : f32
    %34 = vector.broadcast %cst_18 : f32 to vector<16x1xf32>
    %35 = arith.maximumf %33, %34 : vector<16x1xf32>
    %36 = math.absf %33 : vector<16x1xf32>
    %cst_19 = arith.constant 0.000000e+00 : f32
    %37 = vector.broadcast %cst_19 : f32 to vector<16x1xf32>
    %38 = arith.subf %37, %36 : vector<16x1xf32>
    %39 = math.exp %38 : vector<16x1xf32>
    %cst_20 = arith.constant 1.000000e+00 : f32
    %40 = vector.broadcast %cst_20 : f32 to vector<16x1xf32>
    %41 = arith.addf %40, %39 : vector<16x1xf32>
    %42 = math.log %41 : vector<16x1xf32>
    %43 = arith.addf %35, %42 : vector<16x1xf32>
    %cst_21 = arith.constant 0.000000e+00 : f32
    %44 = vector.broadcast %cst_21 : f32 to vector<16x1xf32>
    %45 = arith.subf %44, %43 : vector<16x1xf32>
    %46 = vector.extract_strided_slice %31 {offsets = [0, 0], sizes = [8, 1], strides = [1, 1]} : vector<16x1xf32> to vector<8x1xf32>
    %47 = vector.extract_strided_slice %31 {offsets = [8, 0], sizes = [8, 1], strides = [1, 1]} : vector<16x1xf32> to vector<8x1xf32>
    %48 = vector.extract_strided_slice %45 {offsets = [0, 0], sizes = [8, 1], strides = [1, 1]} : vector<16x1xf32> to vector<8x1xf32>
    %49 = vector.extract_strided_slice %45 {offsets = [8, 0], sizes = [8, 1], strides = [1, 1]} : vector<16x1xf32> to vector<8x1xf32>
    %50 = tpu.iota {dimensions = array<i32: 0>} : vector<8x1xi32>
    %c2_i32 = arith.constant 2 : i32
    %51 = vector.broadcast %c2_i32 : i32 to vector<8x1xi32>
    %52 = arith.cmpi slt, %50, %51 : vector<8x1xi32>
    %53 = arith.extui %52 : vector<8x1xi1> to vector<8x1xi32>
    %54 = arith.sitofp %53 : vector<8x1xi32> to vector<8x1xf32>
    %55 = math.exp %47 : vector<8x1xf32>
    %56 = arith.subf %47, %46 : vector<8x1xf32>
    %57 = arith.mulf %55, %56 : vector<8x1xf32>
    %58 = math.exp %49 : vector<8x1xf32>
    %59 = arith.subf %49, %48 : vector<8x1xf32>
    %60 = arith.mulf %58, %59 : vector<8x1xf32>
    %61 = arith.addf %57, %60 : vector<8x1xf32>
    %62 = math.exp %46 : vector<8x1xf32>
    %63 = arith.subf %46, %47 : vector<8x1xf32>
    %64 = arith.mulf %62, %63 : vector<8x1xf32>
    %65 = math.exp %48 : vector<8x1xf32>
    %66 = arith.subf %48, %49 : vector<8x1xf32>
    %67 = arith.mulf %65, %66 : vector<8x1xf32>
    %68 = arith.addf %64, %67 : vector<8x1xf32>
    %69 = arith.mulf %61, %54 : vector<8x1xf32>
    %70 = vector.shape_cast %69 : vector<8x1xf32> to vector<1x8x1xf32>
    %cst_22 = arith.constant dense<0.000000e+00> : vector<1xf32>
    %71 = vector.multi_reduction <add>, %70, %cst_22 [1, 2] : vector<1x8x1xf32> to vector<1xf32>
    %72 = vector.shape_cast %71 : vector<1xf32> to vector<1x1x1xf32>
    %73 = vector.extract %72[0, 0, 0] : f32 from vector<1x1x1xf32>
    %74 = arith.mulf %68, %54 : vector<8x1xf32>
    %75 = vector.shape_cast %74 : vector<8x1xf32> to vector<1x8x1xf32>
    %cst_23 = arith.constant dense<0.000000e+00> : vector<1xf32>
    %76 = vector.multi_reduction <add>, %75, %cst_23 [1, 2] : vector<1x8x1xf32> to vector<1xf32>
    %77 = vector.shape_cast %76 : vector<1xf32> to vector<1x1x1xf32>
    %78 = vector.extract %77[0, 0, 0] : f32 from vector<1x1x1xf32>
    %79 = arith.addf %73, %78 : f32
    %cst_24 = arith.constant 5.000000e-01 : f32
    %80 = arith.mulf %cst_24, %79 : f32
    %cst_25 = arith.constant 4.000000e+00 : f32
    %81 = arith.divf %80, %cst_25 : f32
    %c0_26 = arith.constant 0 : index
    %c0_27 = arith.constant 0 : index
    %82 = vector.load %arg0[%c0_26, %c0_27] : memref<8x1xi32, #tpu.memory_space<vmem>>, vector<8x1xi32>
    %c1_i32 = arith.constant 1 : i32
    %83 = vector.broadcast %c1_i32 : i32 to vector<8x1xi32>
    %84 = arith.cmpi eq, %82, %83 : vector<8x1xi32>
    %85 = arith.extui %84 : vector<8x1xi1> to vector<8x1xi32>
    %86 = arith.sitofp %85 : vector<8x1xi32> to vector<8x1xf32>
    %cst_28 = arith.constant 1.000000e+00 : f32
    %87 = vector.broadcast %cst_28 : f32 to vector<8x1xf32>
    %88 = arith.subf %87, %86 : vector<8x1xf32>
    %89 = arith.mulf %46, %88 : vector<8x1xf32>
    %90 = arith.mulf %48, %86 : vector<8x1xf32>
    %91 = arith.addf %89, %90 : vector<8x1xf32>
    %cst_29 = arith.constant 0.000000e+00 : f32
    %92 = vector.broadcast %cst_29 : f32 to vector<8x1xf32>
    %93 = arith.subf %92, %91 : vector<8x1xf32>
    %94 = arith.mulf %93, %54 : vector<8x1xf32>
    %95 = vector.shape_cast %94 : vector<8x1xf32> to vector<1x8x1xf32>
    %cst_30 = arith.constant dense<0.000000e+00> : vector<1xf32>
    %96 = vector.multi_reduction <add>, %95, %cst_30 [1, 2] : vector<1x8x1xf32> to vector<1xf32>
    %97 = vector.shape_cast %96 : vector<1xf32> to vector<1x1x1xf32>
    %98 = vector.extract %97[0, 0, 0] : f32 from vector<1x1x1xf32>
    %cst_31 = arith.constant 2.000000e+00 : f32
    %99 = arith.divf %98, %cst_31 : f32
    %cst_32 = arith.constant 1.000000e-01 : f32
    %100 = arith.mulf %cst_32, %81 : f32
    %101 = arith.addf %99, %100 : f32
    %c0_33 = arith.constant 0 : index
    %c0_34 = arith.constant 0 : index
    %102 = memref.load %arg7[%c0_33, %c0_34] : memref<1x1xf32, #tpu.memory_space<smem>>
    memref.store %101, %arg7[%c0_33, %c0_34] : memref<1x1xf32, #tpu.memory_space<smem>>
    %103 = tpu.iota {dimensions = array<i32: 1>} : vector<8x128xi32>
    %104 = math.exp %46 : vector<8x1xf32>
    %105 = math.exp %48 : vector<8x1xf32>
    %c0_i32 = arith.constant 0 : i32
    %106 = vector.broadcast %c0_i32 : i32 to vector<8x128xi32>
    %107 = arith.cmpi eq, %103, %106 : vector<8x128xi32>
    %c1_i32_35 = arith.constant 1 : i32
    %108 = vector.broadcast %c1_i32_35 : i32 to vector<8x128xi32>
    %109 = arith.cmpi eq, %103, %108 : vector<8x128xi32>
    %cst_36 = arith.constant 0.000000e+00 : f32
    %110 = vector.shape_cast %105 : vector<8x1xf32> to vector<8x1xf32>
    %111 = vector.broadcast %110 : vector<8x1xf32> to vector<8x128xf32>
    %112 = vector.broadcast %cst_36 : f32 to vector<8x128xf32>
    %113 = arith.select %109, %111, %112 : vector<8x128xi1>, vector<8x128xf32>
    %114 = vector.shape_cast %104 : vector<8x1xf32> to vector<8x1xf32>
    %115 = vector.broadcast %114 : vector<8x1xf32> to vector<8x128xf32>
    %116 = arith.select %107, %115, %113 : vector<8x128xi1>, vector<8x128xf32>
    %c0_37 = arith.constant 0 : index
    %c0_38 = arith.constant 0 : index
    %117 = vector.load %arg8[%c0_37, %c0_38] : memref<8x128xf32, #tpu.memory_space<vmem>>, vector<8x128xf32>
    tpu.vector_store %arg8[%c0_37, %c0_38], %116 {strides = array<i32>} : memref<8x128xf32, #tpu.memory_space<vmem>>, vector<8x128xf32>,
    return
  }
}

</mosaic_0001>

<llo_original>
// kernel: tpu_custom_call.1
$region0: #{tpu_custom_call.1}
  #allocation0 [shape = 'u32[]', space=smem, size = 0x4, offset = 0x4, fixed_abs, tag = 'smem constant byte address 0x4 - core index']
  #allocation1 [shape = 'u32[144,128]{1,0:T(1,128)}', space=vmem, size = 0x12000, scoped, tag = 'internal scratch']
  %s0 = inlined_call_operand.vmem [shape: s32[8,1], index: 0, kind: input, shape index: {}]
  %s1 = inlined_call_operand.vmem [shape: f32[8,128], index: 1, kind: input, shape index: {}]
  %s2 = inlined_call_operand.hbm [shape: f32[128,128], index: 2, kind: input, shape index: {}]
  %s3 = inlined_call_operand.vmem [shape: f32[1,128], index: 3, kind: input, shape index: {}]
  %s4 = inlined_call_operand.hbm [shape: f32[128,128], index: 4, kind: input, shape index: {}]
  %s5 = inlined_call_operand.vmem [shape: f32[1,128], index: 5, kind: input, shape index: {}]
  %s6 = inlined_call_operand.vmem [shape: f32[16,128], index: 6, kind: input, shape index: {}]
  %s7 = inlined_call_operand.hbm [shape: f32[1,1], index: 7, kind: output, shape index: {0}]
  %s8 = inlined_call_operand.hbm [shape: f32[8,128], index: 8, kind: output, shape index: {1}]
  %9 = xla_tuple %s7, %s8
  %s10 = sld [smem:[#allocation0]]
  $region54: #{tpu_custom_call.1} parent=0
    _
  %s12 = ssub.s32 1, %s10
  %s13 = scalar_select 0, %s12, %s10
  $region1: #{tpu_custom_call.1} parent=0
    #allocation2 [shape = 'u8[65536]{0}', space=vmem, size = 0x10000, scoped, tag = 'input window, operand 2, single buffered']
    #allocation3 [shape = 's32[1]{0}', space=sflag, size = 0x4, scoped, tag = 'scoped memory for tpu_custom_call.1']
    #allocation4 [shape = 's32[1]{0}', space=sflag, size = 0x4, scoped, tag = 'scoped memory for tpu_custom_call.1']
    #allocation5 [shape = 's32[1]{0}', space=sflag, size = 0x4, scoped, tag = 'scoped memory for tpu_custom_call.1']
    #allocation6 [shape = 'u8[65536]{0}', space=vmem, size = 0x10000, scoped, tag = 'input window, operand 4, single buffered']
    #allocation7 [shape = 's32[1]{0}', space=sflag, size = 0x4, scoped, tag = 'scoped memory for tpu_custom_call.1']
    #allocation8 [shape = 'u8[512]{0}', space=smem, size = 0x200, scoped, tag = 'output window, operand 0, single buffered']
    #allocation9 [shape = 'u8[4096]{0}', space=vmem, size = 0x1000, scoped, tag = 'output window, operand 1, single buffered']
    %14 = vsyncpa [#allocation3], 0
    %15 = vsyncpa [#allocation7], 0
    %16 = vsyncpa [#allocation5], 0
    %17 = vsyncpa [#allocation4], 0
    // Predicated region
    $region2: #{tpu_custom_call.1} parent=1 // pred_check
      _
    $region3: #{tpu_custom_call.1} parent=1 // pred_check_branch
      %19 = sbr.rel (0) target = $region5
    $region4: #{tpu_custom_call.1} parent=1 // pred_region
      _
    $region5: #{tpu_custom_call.1} parent=1 // pred_fallthru
      _
    // Predicated region
    $region6: #{tpu_custom_call.1} parent=1 // pred_check
      _
    $region7: #{tpu_custom_call.1} parent=1 // pred_check_branch
      %21 = sbr.rel (0) target = $region9
    $region8: #{tpu_custom_call.1} parent=1 // pred_region
      _
    $region9: #{tpu_custom_call.1} parent=1 // pred_fallthru
      _
    // Predicated region
    $region10: #{tpu_custom_call.1} parent=1 // pred_check
      _
    $region11: #{tpu_custom_call.1} parent=1 // pred_check_branch
      %23 = sbr.rel (0) target = $region13
    $region12: #{tpu_custom_call.1} parent=1 // pred_region
      %s25 = ssub.s32 2048, 2048
      %26 = vsyncadd [#allocation3], %s25
      %s27 = sshll.u32 [#allocation2], 4
      %s28 = int_to_ptr.vmem [resolvable:$true] %s27
      %33 = dma.hbm_to_vmem [thread:$0]  %s2, 2048, %s28, [#allocation3], 128, 128, 8
    $region13: #{tpu_custom_call.1} parent=1 // pred_fallthru
      _
    // Predicated region
    $region14: #{tpu_custom_call.1} parent=1 // pred_check
      _
    $region15: #{tpu_custom_call.1} parent=1 // pred_check_branch
      %35 = sbr.rel (0) target = $region17
    $region16: #{tpu_custom_call.1} parent=1 // pred_region
      _
    $region17: #{tpu_custom_call.1} parent=1 // pred_fallthru
      _
    // Predicated region
    $region18: #{tpu_custom_call.1} parent=1 // pred_check
      _
    $region19: #{tpu_custom_call.1} parent=1 // pred_check_branch
      %37 = sbr.rel (0) target = $region21
    $region20: #{tpu_custom_call.1} parent=1 // pred_region
      %s39 = ssub.s32 2048, 2048
      %40 = vsyncadd [#allocation7], %s39
      %s41 = sshll.u32 [#allocation6], 4
      %s42 = int_to_ptr.vmem [resolvable:$true] %s41
      %47 = dma.hbm_to_vmem [thread:$0]  %s4, 2048, %s42, [#allocation7], 128, 128, 8
    $region21: #{tpu_custom_call.1} parent=1 // pred_fallthru
      _
    // Predicated region
    $region22: #{tpu_custom_call.1} parent=1 // pred_check
      _
    $region23: #{tpu_custom_call.1} parent=1 // pred_check_branch
      %49 = sbr.rel (0) target = $region25
    $region24: #{tpu_custom_call.1} parent=1 // pred_region
      _
    $region25: #{tpu_custom_call.1} parent=1 // pred_fallthru
      _
    // Predicated region
    $region26: #{tpu_custom_call.1} parent=1 // pred_check
      _
    $region27: #{tpu_custom_call.1} parent=1 // pred_check_branch
      %51 = sbr.rel (0) target = $region29
    $region28: #{tpu_custom_call.1} parent=1 // pred_region
      _
    $region29: #{tpu_custom_call.1} parent=1 // pred_fallthru
      _
    // Predicated region
    $region30: #{tpu_custom_call.1} parent=1 // pred_check
      _
    $region31: #{tpu_custom_call.1} parent=1 // pred_check_branch
      %53 = sbr.rel (0) target = $region33
    $region32: #{tpu_custom_call.1} parent=1 // pred_region
      %54 = dma.done [#allocation3], 2048
    $region33: #{tpu_custom_call.1} parent=1 // pred_fallthru
      _
    // Predicated region
    $region34: #{tpu_custom_call.1} parent=1 // pred_check
      _
    $region35: #{tpu_custom_call.1} parent=1 // pred_check_branch
      %56 = sbr.rel (0) target = $region37
    $region36: #{tpu_custom_call.1} parent=1 // pred_region
      %57 = dma.done [#allocation7], 2048
    $region37: #{tpu_custom_call.1} parent=1 // pred_fallthru
      _
    %v58 = vld [vmem:[%s1] sm:$0xff]
    %v59 = vld [vmem:[#allocation2] sm:$0xff]
    %v60 = vld [vmem:[#allocation2 + $0x8] sm:$0xff]
    %v61 = vld [vmem:[#allocation2 + $0x10] sm:$0xff]
    %v62 = vld [vmem:[#allocation2 + $0x18] sm:$0xff]
    %v63 = vld [vmem:[#allocation2 + $0x20] sm:$0xff]
    %v64 = vld [vmem:[#allocation2 + $0x28] sm:$0xff]
    %v65 = vld [vmem:[#allocation2 + $0x30] sm:$0xff]
    %v66 = vld [vmem:[#allocation2 + $0x38] sm:$0xff]
    %v67 = vld [vmem:[#allocation2 + $0x40] sm:$0xff]
    %v68 = vld [vmem:[#allocation2 + $0x48] sm:$0xff]
    %v69 = vld [vmem:[#allocation2 + $0x50] sm:$0xff]
    %v70 = vld [vmem:[#allocation2 + $0x58] sm:$0xff]
    %v71 = vld [vmem:[#allocation2 + $0x60] sm:$0xff]
    %v72 = vld [vmem:[#allocation2 + $0x68] sm:$0xff]
    %v73 = vld [vmem:[#allocation2 + $0x70] sm:$0xff]
    %v74 = vld [vmem:[#allocation2 + $0x78] sm:$0xff]
    %v75 = vld [vmem:[%s3] sm:$0x1]
    %v77 = vlaneseq
    %v78 = vshrl.u32 %v77, 7
    %v79 = vsub.s32 0, %v78
    %v80 = vrot.slane %v75, %v79
    %82 = vmatprep.subr.mxu0 0.0
    %83 = vmatpush1.msra.mxu0 %v59
    %84 = vmatprep.subr.mxu0 0.0
    %85 = vmatpush1.msra.mxu0 %v60
    %86 = vmatprep.subr.mxu0 0.0
    %87 = vmatpush1.msra.mxu0 %v61
    %88 = vmatprep.subr.mxu0 0.0
    %89 = vmatpush1.msra.mxu0 %v62
    %90 = vmatprep.subr.mxu0 0.0
    %91 = vmatpush1.msra.mxu0 %v63
    %92 = vmatprep.subr.mxu0 0.0
    %93 = vmatpush1.msra.mxu0 %v64
    %94 = vmatprep.subr.mxu0 0.0
    %95 = vmatpush1.msra.mxu0 %v65
    %96 = vmatprep.subr.mxu0 0.0
    %97 = vmatpush1.msra.mxu0 %v66
    %98 = vmatprep.subr.mxu0 0.0
    %99 = vmatpush1.msra.mxu0 %v67
    %100 = vmatprep.subr.mxu0 0.0
    %101 = vmatpush1.msra.mxu0 %v68
    %102 = vmatprep.subr.mxu0 0.0
    %103 = vmatpush1.msra.mxu0 %v69
    %104 = vmatprep.subr.mxu0 0.0
    %105 = vmatpush1.msra.mxu0 %v70
    %106 = vmatprep.subr.mxu0 0.0
    %107 = vmatpush1.msra.mxu0 %v71
    %108 = vmatprep.subr.mxu0 0.0
    %109 = vmatpush1.msra.mxu0 %v72
    %110 = vmatprep.subr.mxu0 0.0
    %111 = vmatpush1.msra.mxu0 %v73
    %112 = vmatprep.subr.mxu0 0.0
    %113 = vmatpush1.msra.mxu0 %v74
    %114 = vmatprep.subr.mxu0 0.0
    %115 = vmatpush1.msra.mxu0 0.0
    %116 = vmatprep.subr.mxu0 0.0
    %117 = vmatpush1.msra.mxu0 0.0
    %118 = vmatprep.subr.mxu0 0.0
    %119 = vmatpush1.msra.mxu0 0.0
    %120 = vmatprep.subr.mxu0 0.0
    %121 = vmatpush1.msra.mxu0 0.0
    %122 = vmatprep.subr.mxu0 0.0
    %123 = vmatpush1.msra.mxu0 0.0
    %124 = vmatprep.subr.mxu0 0.0
    %125 = vmatpush1.msra.mxu0 0.0
    %126 = vmatprep.subr.mxu0 0.0
    %127 = vmatpush1.msra.mxu0 0.0
    %128 = vmatprep.subr.mxu0 0.0
    %129 = vmatpush1.msra.mxu0 0.0
    %130 = vmatprep.subr.mxu0 0.0
    %131 = vmatpush1.msra.mxu0 0.0
    %132 = vmatprep.subr.mxu0 0.0
    %133 = vmatpush1.msra.mxu0 0.0
    %134 = vmatprep.subr.mxu0 0.0
    %135 = vmatpush1.msra.mxu0 0.0
    %136 = vmatprep.subr.mxu0 0.0
    %137 = vmatpush1.msra.mxu0 0.0
    %138 = vmatprep.subr.mxu0 0.0
    %139 = vmatpush1.msra.mxu0 0.0
    %140 = vmatprep.subr.mxu0 0.0
    %141 = vmatpush1.msra.mxu0 0.0
    %142 = vmatprep.subr.mxu0 0.0
    %143 = vmatpush1.msra.mxu0 0.0
    %144 = vmatprep.subr.mxu0 0.0
    %145 = vmatpush1.msra.mxu0 0.0
    %146 = vmatprep.mubr.f32.mxu0 0.0
    %147 = vmatmul.mubr.f32.gmra.mrb[0].mxu0 %v58
    %v148 = vpop.f32.mrb[0].mxu0
    %v149 = vadd.f32 %v80, %v148
    %v150 = vpop.f32.mrb[0].mxu0
    %151 = vdwg.mxu0
    %v152 = vtanh.pop %v149
    %v153 = vld [vmem:[%s6] sm:$0xff]
    %v154 = vld [vmem:[%s6 + $0x8] sm:$0xff]
    %v155 = vmul.f32 %v152, %v153
    %v156 = vmul.f32 %v152, %v154
    %v157 = vmul.f32 %v155, 1.1111112
    %v158 = vmul.f32 %v156, 1.1111112
    %v159 = vld [vmem:[#allocation6] sm:$0xff]
    %v160 = vld [vmem:[#allocation6 + $0x8] sm:$0xff]
    %v161 = vld [vmem:[#allocation6 + $0x10] sm:$0xff]
    %v162 = vld [vmem:[#allocation6 + $0x18] sm:$0xff]
    %v163 = vld [vmem:[#allocation6 + $0x20] sm:$0xff]
    %v164 = vld [vmem:[#allocation6 + $0x28] sm:$0xff]
    %v165 = vld [vmem:[#allocation6 + $0x30] sm:$0xff]
    %v166 = vld [vmem:[#allocation6 + $0x38] sm:$0xff]
    %v167 = vld [vmem:[#allocation6 + $0x40] sm:$0xff]
    %v168 = vld [vmem:[#allocation6 + $0x48] sm:$0xff]
    %v169 = vld [vmem:[#allocation6 + $0x50] sm:$0xff]
    %v170 = vld [vmem:[#allocation6 + $0x58] sm:$0xff]
    %v171 = vld [vmem:[#allocation6 + $0x60] sm:$0xff]
    %v172 = vld [vmem:[#allocation6 + $0x68] sm:$0xff]
    %v173 = vld [vmem:[#allocation6 + $0x70] sm:$0xff]
    %v174 = vld [vmem:[#allocation6 + $0x78] sm:$0xff]
    %v175 = vld [vmem:[%s5] sm:$0x1]
    %v177 = vlaneseq
    %v178 = vshrl.u32 %v177, 7
    %v179 = vsub.s32 0, %v178
    %v180 = vrot.slane %v175, %v179
    %182 = vmatprep.subr.mxu0 0.0
    %183 = vmatpush1.msra.mxu0 %v159
    %184 = vmatprep.subr.mxu0 0.0
    %185 = vmatpush1.msra.mxu0 %v160
    %186 = vmatprep.subr.mxu0 0.0
    %187 = vmatpush1.msra.mxu0 %v161
    %188 = vmatprep.subr.mxu0 0.0
    %189 = vmatpush1.msra.mxu0 %v162
    %190 = vmatprep.subr.mxu0 0.0
    %191 = vmatpush1.msra.mxu0 %v163
    %192 = vmatprep.subr.mxu0 0.0
    %193 = vmatpush1.msra.mxu0 %v164
    %194 = vmatprep.subr.mxu0 0.0
    %195 = vmatpush1.msra.mxu0 %v165
    %196 = vmatprep.subr.mxu0 0.0
    %197 = vmatpush1.msra.mxu0 %v166
    %198 = vmatprep.subr.mxu0 0.0
    %199 = vmatpush1.msra.mxu0 %v167
    %200 = vmatprep.subr.mxu0 0.0
    %201 = vmatpush1.msra.mxu0 %v168
    %202 = vmatprep.subr.mxu0 0.0
    %203 = vmatpush1.msra.mxu0 %v169
    %204 = vmatprep.subr.mxu0 0.0
    %205 = vmatpush1.msra.mxu0 %v170
    %206 = vmatprep.subr.mxu0 0.0
    %207 = vmatpush1.msra.mxu0 %v171
    %208 = vmatprep.subr.mxu0 0.0
    %209 = vmatpush1.msra.mxu0 %v172
    %210 = vmatprep.subr.mxu0 0.0
    %211 = vmatpush1.msra.mxu0 %v173
    %212 = vmatprep.subr.mxu0 0.0
    %213 = vmatpush1.msra.mxu0 %v174
    %214 = vmatprep.subr.mxu0 0.0
    %215 = vmatpush1.msra.mxu0 0.0
    %216 = vmatprep.subr.mxu0 0.0
    %217 = vmatpush1.msra.mxu0 0.0
    %218 = vmatprep.subr.mxu0 0.0
    %219 = vmatpush1.msra.mxu0 0.0
    %220 = vmatprep.subr.mxu0 0.0
    %221 = vmatpush1.msra.mxu0 0.0
    %222 = vmatprep.subr.mxu0 0.0
    %223 = vmatpush1.msra.mxu0 0.0
    %224 = vmatprep.subr.mxu0 0.0
    %225 = vmatpush1.msra.mxu0 0.0
    %226 = vmatprep.subr.mxu0 0.0
    %227 = vmatpush1.msra.mxu0 0.0
    %228 = vmatprep.subr.mxu0 0.0
    %229 = vmatpush1.msra.mxu0 0.0
    %230 = vmatprep.subr.mxu0 0.0
    %231 = vmatpush1.msra.mxu0 0.0
    %232 = vmatprep.subr.mxu0 0.0
    %233 = vmatpush1.msra.mxu0 0.0
    %234 = vmatprep.subr.mxu0 0.0
    %235 = vmatpush1.msra.mxu0 0.0
    %236 = vmatprep.subr.mxu0 0.0
    %237 = vmatpush1.msra.mxu0 0.0
    %238 = vmatprep.subr.mxu0 0.0
    %239 = vmatpush1.msra.mxu0 0.0
    %240 = vmatprep.subr.mxu0 0.0
    %241 = vmatpush1.msra.mxu0 0.0
    %242 = vmatprep.subr.mxu0 0.0
    %243 = vmatpush1.msra.mxu0 0.0
    %244 = vmatprep.subr.mxu0 0.0
    %245 = vmatpush1.msra.mxu0 0.0
    %246 = vmatprep.mubr.f32.mxu0 0.0
    %247 = vmatmul.mubr.f32.gmra.mrb[0].mxu0 %v157
    %v248 = vpop.f32.mrb[0].mxu0
    %v249 = vadd.f32 %v180, %v248
    %v250 = vpop.f32.mrb[0].mxu0
    %251 = vmatprep.mubr.f32.mxu0 0.0
    %252 = vmatmul.mubr.f32.gmra.mrb[0].mxu0 %v158
    %v253 = vpop.f32.mrb[0].mxu0
    %v254 = vadd.f32 %v180, %v253
    %v255 = vpop.f32.mrb[0].mxu0
    %256 = vdwg.mxu0
    %259 = vrot.lane.b32.xlu0 %v249, 1
    %v260 = vpop.permute.xlu0 %259
    %261 = vrot.lane.b32.xlu0 %v254, 1
    %v262 = vpop.permute.xlu0 %261
    %v265 = vsub.f32 %v249, %v260
    %v266 = vsub.f32 %v254, %v262
    %v267 = vmax.f32 %v265, 0.0
    %v268 = vmax.f32 %v266, 0.0
    %v269 = vand.u32 2147483647, %v265
    %v270 = vand.u32 2147483647, %v266
    %v271 = vsub.f32 0.0, %v269
    %v272 = vsub.f32 0.0, %v270
    %v273 = vmul.f32 %v271, 1.442695
    %v274 = vpow.pop %v273
    %v275 = vmul.f32 %v272, 1.442695
    %v276 = vpow.pop %v275
    %v277 = vadd.f32 %v274, 1.0
    %v278 = vadd.f32 %v276, 1.0
    %v279 = vlog2.pop %v277
    %v280 = vmul.f32 %v279, 0.6931472
    %v281 = vlog2.pop %v278
    %v282 = vmul.f32 %v281, 0.6931472
    %v283 = vadd.f32 %v267, %v280
    %v284 = vadd.f32 %v268, %v282
    %v285 = vsub.f32 0.0, %v283
    %v286 = vsub.f32 0.0, %v284
    %v287 = vsub.f32 0.0, %v265
    %v288 = vsub.f32 0.0, %v266
    %v289 = vmax.f32 %v287, 0.0
    %v290 = vmax.f32 %v288, 0.0
    %v291 = vand.u32 2147483647, %v287
    %v292 = vand.u32 2147483647, %v288
    %v293 = vsub.f32 0.0, %v291
    %v294 = vsub.f32 0.0, %v292
    %v295 = vmul.f32 %v293, 1.442695
    %v296 = vpow.pop %v295
    %v297 = vmul.f32 %v294, 1.442695
    %v298 = vpow.pop %v297
    %v299 = vadd.f32 %v296, 1.0
    %v300 = vadd.f32 %v298, 1.0
    %v301 = vlog2.pop %v299
    %v302 = vmul.f32 %v301, 0.6931472
    %v303 = vlog2.pop %v300
    %v304 = vmul.f32 %v303, 0.6931472
    %v305 = vadd.f32 %v289, %v302
    %v306 = vadd.f32 %v290, %v304
    %v307 = vsub.f32 0.0, %v305
    %v308 = vsub.f32 0.0, %v306
    %v309 = vlaneseq
    %v310 = vshrl.u32 %v309, 7
    %vm311 = vcmp.lt.s32.totalorder %v310, 2
    %v312 = vsel %vm311, 1, 0
    %v313 = vcvt.s32.f32 %v312
    %v314 = vmul.f32 %v286, 1.442695
    %v315 = vpow.pop %v314
    %v316 = vsub.f32 %v286, %v285
    %v317 = vmul.f32 %v315, %v316
    %v318 = vmul.f32 %v308, 1.442695
    %v319 = vpow.pop %v318
    %v320 = vsub.f32 %v308, %v307
    %v321 = vmul.f32 %v319, %v320
    %v322 = vadd.f32 %v317, %v321
    %v323 = vmul.f32 %v285, 1.442695
    %v324 = vpow.pop %v323
    %v325 = vsub.f32 %v285, %v286
    %v326 = vmul.f32 %v324, %v325
    %v327 = vmul.f32 %v307, 1.442695
    %v328 = vpow.pop %v327
    %v329 = vsub.f32 %v307, %v308
    %v330 = vmul.f32 %v328, %v329
    %v331 = vadd.f32 %v326, %v330
    %v332 = vmul.f32 %v322, %v313
    %334 = vrot.lane.b32.xlu0 %v332, 127
    %v335 = vpop.permute.xlu0 %334
    %vm337 = vcmask 7168
    %v338 = vsel %vm337, %v335, 0.0
    %339 = vadd.xlane.f32.xlu0 %v338
    %v340 = vpop.xlane.xlu0 %339
    %v341 = vrot.slane %v340, 4
    %v342 = vadd.f32 %v340, %v341
    %v343 = vrot.slane %v342, 2
    %v344 = vadd.f32 %v342, %v343
    %v345 = vrot.slane %v344, 1
    %v346 = vadd.f32 %v344, %v345
    %s347 = vtos %v346
    %v348 = vmul.f32 %v331, %v313
    %350 = vrot.lane.b32.xlu0 %v348, 127
    %v351 = vpop.permute.xlu0 %350
    %v353 = vsel %vm337, %v351, 0.0
    %354 = vadd.xlane.f32.xlu0 %v353
    %v355 = vpop.xlane.xlu0 %354
    %v356 = vrot.slane %v355, 4
    %v357 = vadd.f32 %v355, %v356
    %v358 = vrot.slane %v357, 2
    %v359 = vadd.f32 %v357, %v358
    %v360 = vrot.slane %v359, 1
    %v361 = vadd.f32 %v359, %v360
    %s362 = vtos %v361
    %s363 = sadd.f32 %s347, %s362
    %s364 = smul.f32 %s363, 0.5
    %v365 = vrcp.pop 4.0
    %s366 = vtos %v365
    %s367 = smul.f32 %s364, %s366
    %v368 = vld [vmem:[%s0] sm:$0xff]
    %vm369 = vcmp.eq.s32.totalorder %v368, 1
    %v370 = vsel %vm369, 1, 0
    %v371 = vcvt.s32.f32 %v370
    %v372 = vsub.f32 1.0, %v371
    %374 = vrot.lane.b32.xlu0 %v372, 1
    %v375 = vpop.permute.xlu0 %374
    %v377 = vmul.f32 %v285, %v375
    %379 = vrot.lane.b32.xlu0 %v371, 1
    %v380 = vpop.permute.xlu0 %379
    %v382 = vmul.f32 %v307, %v380
    %v383 = vadd.f32 %v377, %v382
    %v384 = vsub.f32 0.0, %v383
    %v385 = vmul.f32 %v384, %v313
    %387 = vrot.lane.b32.xlu0 %v385, 127
    %v388 = vpop.permute.xlu0 %387
    %v390 = vsel %vm337, %v388, 0.0
    %391 = vadd.xlane.f32.xlu0 %v390
    %v392 = vpop.xlane.xlu0 %391
    %v393 = vrot.slane %v392, 4
    %v394 = vadd.f32 %v392, %v393
    %v395 = vrot.slane %v394, 2
    %v396 = vadd.f32 %v394, %v395
    %v397 = vrot.slane %v396, 1
    %v398 = vadd.f32 %v396, %v397
    %s399 = vtos %v398
    %v400 = vrcp.pop 2.0
    %s401 = vtos %v400
    %s402 = smul.f32 %s399, %s401
    %s403 = smul.f32 %s367, 0.1
    %s404 = sadd.f32 %s402, %s403
    %s405 = scalar_lea.smem [#allocation8], 0
    %406 = sst [smem:[%s405]] %s404
    %v407 = vlaneseq
    %v408 = vand.u32 %v407, 127
    %vm409 = vcmp.eq.s32.totalorder %v408, 0
    %vm410 = vcmp.eq.s32.totalorder %v408, 1
    %412 = vset.pattern.permute.xlu0 1
    %413 = vperm.xlu0 %412, %v328
    %v414 = vpop.permute.xlu0 %413
    %v416 = vsel %vm410, %v414, 0.0
    %418 = vset.pattern.permute.xlu0 1
    %419 = vperm.xlu0 %418, %v324
    %v420 = vpop.permute.xlu0 %419
    %v422 = vsel %vm409, %v420, %v416
    %423 = vst [vmem:[#allocation9] sm:$0xff] %v422
    // Predicated region
    $region38: #{tpu_custom_call.1} parent=1 // pred_check
      _
    $region39: #{tpu_custom_call.1} parent=1 // pred_check_branch
      %425 = sbr.rel (0) target = $region41
    $region40: #{tpu_custom_call.1} parent=1 // pred_region
      %s427 = ssub.s32 16, 16
      %428 = vsyncadd [#allocation5], %s427
      %431 = dma.smem_to_hbm [#allocation8], 16, %s7, [#allocation5]
    $region41: #{tpu_custom_call.1} parent=1 // pred_fallthru
      _
    // Predicated region
    $region42: #{tpu_custom_call.1} parent=1 // pred_check
      _
    $region43: #{tpu_custom_call.1} parent=1 // pred_check_branch
      %433 = sbr.rel (0) target = $region45
    $region44: #{tpu_custom_call.1} parent=1 // pred_region
      %s435 = ssub.s32 128, 128
      %436 = vsyncadd [#allocation4], %s435
      %s438 = sshll.u32 [#allocation9], 4
      %s439 = int_to_ptr.vmem [resolvable:$true] %s438
      %441 = dma.vmem_to_hbm [thread:$0]  %s439, 128, %s8, [#allocation4]
    $region45: #{tpu_custom_call.1} parent=1 // pred_fallthru
      _
    // Predicated region
    $region46: #{tpu_custom_call.1} parent=1 // pred_check
      _
    $region47: #{tpu_custom_call.1} parent=1 // pred_check_branch
      %443 = sbr.rel (0) target = $region49
    $region48: #{tpu_custom_call.1} parent=1 // pred_region
      %444 = dma.done [#allocation5], 16
    $region49: #{tpu_custom_call.1} parent=1 // pred_fallthru
      _
    // Predicated region
    $region50: #{tpu_custom_call.1} parent=1 // pred_check
      _
    $region51: #{tpu_custom_call.1} parent=1 // pred_check_branch
      %446 = sbr.rel (0) target = $region53
    $region52: #{tpu_custom_call.1} parent=1 // pred_region
      %447 = dma.done [#allocation4], 128
    $region53: #{tpu_custom_call.1} parent=1 // pred_fallthru
      _
    %448 = sfence
    %449 = vsyncpa [#allocation3], 1
    %450 = vsyncpa [#allocation7], 1
    %451 = vsyncpa [#allocation4], 1
    %452 = vsyncpa [#allocation5], 1

</llo_original>
